<compile_context>
chip_gen: v6e
topology: v6e:2x2x1
jax: 0.10.0
libtpu: 0.0.40
codegen_flags: <defaults>
</compile_context>

<pallas_src>
import functools
import math

import jax
import jax.numpy as jnp
from jax.experimental import pallas as pl
from jax.experimental.pallas import tpu as pltpu


# --------------------------------------------------------------------------
# Tiling helpers
# --------------------------------------------------------------------------
def _round_up(x, m):
    return ((x + m - 1) // m) * m


def _pick_tile(dim, pref, align):
    """Largest tile <= pref that is a multiple of `align` and divides dim;
    falls back to the full dimension (only used for weight/feature dims,
    which are small or nicely divisible)."""
    if dim <= pref:
        return dim
    for t in range(pref, align - 1, -align):
        if dim % t == 0:
            return t
    return dim


# --------------------------------------------------------------------------
# Tiled linear:  Y = act(LN(X) W + b) [+ residual]
#   - fuse_ln  : LN over the full feature dim (tk == din, nk == 1), result
#                cached in a bf16 VMEM scratch and reused across j blocks.
#   - use_acc  : only when nk > 1 (non-fused K-split path).
# --------------------------------------------------------------------------
def _make_linear_kernel(*, act, has_bias, fuse_ln, has_res, use_acc, eps):
    assert not (fuse_ln and use_acc)

    def kernel(*refs):
        it = iter(refs)
        x_ref = next(it)
        w_ref = next(it)
        b_ref = next(it) if has_bias else None
        if fuse_ln:
            g_ref, bln_ref = next(it), next(it)
        r_ref = next(it) if has_res else None
        o_ref = next(it)
        xn_ref = next(it) if fuse_ln else None
        acc_ref = next(it) if use_acc else None

        j = pl.program_id(1)
        k = pl.program_id(2)

        def _finish(h):
            if has_bias:
                h = h + b_ref[...].astype(jnp.float32)
            if act == "quick_gelu":                      # OpenAI CLIP QuickGELU
                h = h * jax.nn.sigmoid(1.702 * h)
            if has_res:
                h = h + r_ref[...].astype(jnp.float32)
            o_ref[...] = h.astype(o_ref.dtype)

        if fuse_ln:
            # LN is computed once per row block (j == 0) and cached in bf16.
            @pl.when(j == 0)
            def _ln():
                x = x_ref[...].astype(jnp.float32)
                mu = jnp.mean(x, axis=-1, keepdims=True)
                var = jnp.mean(x * x, axis=-1, keepdims=True) - mu * mu
                xn = (x - mu) * jax.lax.rsqrt(var + eps)
                xn = xn * g_ref[...] + bln_ref[...]
                xn_ref[...] = xn.astype(jnp.bfloat16)

            xin = xn_ref[...]
        else:
            xin = x_ref[...].astype(jnp.bfloat16)

        partial = jnp.dot(xin, w_ref[...].astype(jnp.bfloat16),
                          preferred_element_type=jnp.float32)

        if use_acc:
            @pl.when(k == 0)
            def _init():
                acc_ref[...] = jnp.zeros_like(acc_ref)

            acc_ref[...] += partial

            @pl.when(k == pl.num_programs(2) - 1)
            def _fin():
                _finish(acc_ref[...])
        else:
            _finish(partial)

    return kernel


def pallas_linear(x, w, b=None, *, act=None, ln=None, residual=None,
                  out_dtype=jnp.bfloat16, tm=256, tn=512, tk=1024, eps=1e-5):
    n, din = x.shape
    dout = w.shape[1]
    fuse_ln = ln is not None

    # Row tiling via padding (never degrade to tiny tiles / oversized blocks).
    tm = min(tm, _round_up(n, 8))
    n_pad = _round_up(n, tm)
    tn = _pick_tile(dout, tn, 128)
    tk = din if fuse_ln else _pick_tile(din, tk, 128)
    nm, nn, nk = n_pad // tm, dout // tn, din // tk
    use_acc = nk > 1

    if n_pad != n:
        x = jnp.pad(x, ((0, n_pad - n), (0, 0)))
        if residual is not None:
            residual = jnp.pad(residual, ((0, n_pad - n), (0, 0)))

    in_specs = [pl.BlockSpec((tm, tk), lambda i, j, k: (i, k)),
                pl.BlockSpec((tk, tn), lambda i, j, k: (k, j))]
    args = [x, w.astype(jnp.bfloat16)]
    if b is not None:
        in_specs.append(pl.BlockSpec((1, tn), lambda i, j, k: (0, j)))
        args.append(b.reshape(1, dout).astype(jnp.float32))
    if fuse_ln:
        g, bln = ln
        in_specs += [pl.BlockSpec((1, tk), lambda i, j, k: (0, k)),
                     pl.BlockSpec((1, tk), lambda i, j, k: (0, k))]
        args += [g.reshape(1, din).astype(jnp.float32),
                 bln.reshape(1, din).astype(jnp.float32)]
    if residual is not None:
        in_specs.append(pl.BlockSpec((tm, tn), lambda i, j, k: (i, j)))
        args.append(residual)

    scratch = []
    if fuse_ln:
        scratch.append(pltpu.VMEM((tm, tk), jnp.bfloat16))   # cached LN(x)
    if use_acc:
        scratch.append(pltpu.VMEM((tm, tn), jnp.float32))    # f32 accumulator

    # LN cache is carried across j -> j must stay sequential on one core.
    sem = (("parallel", "arbitrary", "arbitrary") if fuse_ln
           else ("parallel", "parallel", "arbitrary"))

    kernel = _make_linear_kernel(act=act, has_bias=b is not None,
                                 fuse_ln=fuse_ln,
                                 has_res=residual is not None,
                                 use_acc=use_acc, eps=eps)
    out = pl.pallas_call(
        kernel,
        out_shape=jax.ShapeDtypeStruct((n_pad, dout), out_dtype),
        grid=(nm, nn, nk),
        in_specs=in_specs,
        out_specs=pl.BlockSpec((tm, tn), lambda i, j, k: (i, j)),
        scratch_shapes=scratch,
        compiler_params=pltpu.CompilerParams(
            dimension_semantics=sem,
            vmem_limit_bytes=32 * 1024 * 1024),
    )(*args)
    return out[:n] if n_pad != n else out


# --------------------------------------------------------------------------
# Standalone row-tiled LayerNorm (only ln_pre; all other LNs are fused)
# --------------------------------------------------------------------------
def _layernorm_kernel(x_ref, g_ref, b_ref, o_ref, *, eps):
    x = x_ref[...].astype(jnp.float32)
    mu = jnp.mean(x, axis=-1, keepdims=True)
    var = jnp.mean(x * x, axis=-1, keepdims=True) - mu * mu
    y = (x - mu) * jax.lax.rsqrt(var + eps)
    o_ref[...] = (y * g_ref[...] + b_ref[...]).astype(o_ref.dtype)


def pallas_layernorm(x, g, b, *, eps=1e-5, out_dtype=jnp.bfloat16, tm=512):
    n, d = x.shape
    tm = min(tm, _round_up(n, 8))
    n_pad = _round_up(n, tm)
    if n_pad != n:
        x = jnp.pad(x, ((0, n_pad - n), (0, 0)))
    out = pl.pallas_call(
        functools.partial(_layernorm_kernel, eps=eps),
        out_shape=jax.ShapeDtypeStruct((n_pad, d), out_dtype),
        grid=(n_pad // tm,),
        in_specs=[pl.BlockSpec((tm, d), lambda i: (i, 0)),
                  pl.BlockSpec((1, d), lambda i: (0, 0)),
                  pl.BlockSpec((1, d), lambda i: (0, 0))],
        out_specs=pl.BlockSpec((tm, d), lambda i: (i, 0)),
        compiler_params=pltpu.CompilerParams(
            dimension_semantics=("parallel",)),
    )(x, g.reshape(1, d).astype(jnp.float32),
      b.reshape(1, d).astype(jnp.float32))
    return out[:n] if n_pad != n else out


# --------------------------------------------------------------------------
# Multi-head attention: grid over (batch, head), one head per grid step.
# Per-head q/k/v are DMA'd as lane-dense (1, 1, S, dh) blocks — no in-kernel
# head slicing, no concatenate.  QK^T via dot_general (no transpose op).
# --------------------------------------------------------------------------
def _attention_kernel(q_ref, k_ref, v_ref, o_ref, *, causal, scale):
    q = q_ref[0, 0]                                           # (S, dh) bf16
    k = k_ref[0, 0]
    v = v_ref[0, 0]
    sc = jax.lax.dot_general(q, k, (((1,), (1,)), ((), ())),
                             preferred_element_type=jnp.float32) * scale
    if causal:
        s = sc.shape[0]
        row = jax.lax.broadcasted_iota(jnp.int32, (s, s), 0)
        col = jax.lax.broadcasted_iota(jnp.int32, (s, s), 1)
        sc = jnp.where(col <= row, sc, -1e30)
    sc = sc - jnp.max(sc, axis=-1, keepdims=True)
    p = jnp.exp(sc)
    inv = pl.reciprocal(jnp.sum(p, axis=-1, keepdims=True), approx=True)
    out = jnp.dot(p.astype(jnp.bfloat16), v,
                  preferred_element_type=jnp.float32) * inv
    o_ref[...] = out[None, None].astype(o_ref.dtype)


def pallas_attention(qkv, n_heads, causal):
    b, s, d3 = qkv.shape
    d = d3 // 3
    dh = d // n_heads
    # Layout plumbing in the wrapper: (B, S, 3*D) -> per-head (B, H, S, dh).
    qkv = qkv.reshape(b, s, 3, n_heads, dh)
    q = qkv[:, :, 0].transpose(0, 2, 1, 3)
    k = qkv[:, :, 1].transpose(0, 2, 1, 3)
    v = qkv[:, :, 2].transpose(0, 2, 1, 3)
    spec = pl.BlockSpec((1, 1, s, dh), lambda bi, hi: (bi, hi, 0, 0))
    out = pl.pallas_call(
        functools.partial(_attention_kernel, causal=causal,
                          scale=1.0 / math.sqrt(dh)),
        out_shape=jax.ShapeDtypeStruct((b, n_heads, s, dh), jnp.bfloat16),
        grid=(b, n_heads),
        in_specs=[spec, spec, spec],
        out_specs=spec,
        compiler_params=pltpu.CompilerParams(
            dimension_semantics=("parallel", "parallel")),
    )(q, k, v)
    return out.transpose(0, 2, 1, 3).reshape(b, s, d)


# --------------------------------------------------------------------------
# Contrastive head: normalize features (eps-stabilized), text normalization
# cached once in VMEM scratch, contraction on last dims (no transpose),
# exp(logit_scale) clamped to 100 and passed via scalar prefetch (SMEM).
# --------------------------------------------------------------------------
def _clip_logits_kernel(ls_ref, img_ref, txt_ref, li_ref, txt_n_ref, *, eps):
    @pl.when(pl.program_id(0) == 0)
    def _():
        t = txt_ref[...].astype(jnp.float32)
        txt_n_ref[...] = t * jax.lax.rsqrt(
            jnp.sum(t * t, axis=-1, keepdims=True) + eps)

    img = img_ref[...].astype(jnp.float32)
    img = img * jax.lax.rsqrt(jnp.sum(img * img, axis=-1, keepdims=True) + eps)
    li_ref[...] = ls_ref[0] * jax.lax.dot_general(
        img, txt_n_ref[...], (((1,), (1,)), ((), ())),
        preferred_element_type=jnp.float32)


def pallas_clip_logits(img_feat, txt_feat, logit_scale, *, tm=256):
    bi, d = img_feat.shape
    bt, _ = txt_feat.shape
    tm = min(tm, _round_up(bi, 8))
    bi_pad = _round_up(bi, tm)
    if bi_pad != bi:
        img_feat = jnp.pad(img_feat, ((0, bi_pad - bi), (0, 0)))
    scale = jnp.minimum(jnp.exp(logit_scale), 100.0)   # CLIP logit_scale clamp
    scale = scale.reshape(1).astype(jnp.float32)
    li = pl.pallas_call(
        functools.partial(_clip_logits_kernel, eps=1e-12),
        out_shape=jax.ShapeDtypeStruct((bi_pad, bt), jnp.float32),
        grid_spec=pltpu.PrefetchScalarGridSpec(
            num_scalar_prefetch=1,
            grid=(bi_pad // tm,),
            in_specs=[pl.BlockSpec((tm, d), lambda i, ls: (i, 0)),
                      pl.BlockSpec((bt, d), lambda i, ls: (0, 0))],
            out_specs=pl.BlockSpec((tm, bt), lambda i, ls: (i, 0)),
            scratch_shapes=[pltpu.VMEM((bt, d), jnp.float32)]),
        compiler_params=pltpu.CompilerParams(
            dimension_semantics=("arbitrary",)),
    )(scale, img_feat, txt_feat)
    li = li[:bi] if bi_pad != bi else li
    return li, li.T


# --------------------------------------------------------------------------
# CLIP-style model built from the kernels above (pure-JAX glue only for
# gathers / reshapes; residual adds are fused into the linear kernels)
# --------------------------------------------------------------------------
def residual_block(x, p, b, s, n_heads, causal):
    d = x.shape[-1]
    # attention branch: fused LN1 + QKV, per-(batch,head) attention,
    # out-proj with the residual add fused in.
    qkv = pallas_linear(x, p["w_qkv"], p["b_qkv"],
                        ln=(p["ln1_g"], p["ln1_b"]))            # (b*s, 3d) bf16
    attn = pallas_attention(qkv.reshape(b, s, 3 * d), n_heads, causal)
    x = pallas_linear(attn.reshape(b * s, d), p["w_o"], p["b_o"], residual=x)
    # MLP branch: fused LN2 + FC (QuickGELU), projection with fused residual.
    h = pallas_linear(x, p["w_fc"], p["b_fc"], act="quick_gelu",
                      ln=(p["ln2_g"], p["ln2_b"]))
    x = pallas_linear(h, p["w_proj"], p["b_proj"], residual=x)
    return x


def encode_image(image, vp, cfg):
    b, c, hh, ww = image.shape
    p = cfg["patch"]
    nh, nw = hh // p, ww // p
    width = cfg["v_width"]
    # Conv2d(stride=patch, bias=False) == patch-extract + matmul
    patches = image.reshape(b, c, nh, p, nw, p).transpose(0, 2, 4, 1, 3, 5)
    patches = patches.reshape(b * nh * nw, c * p * p)
    x = pallas_linear(patches, vp["conv_w"], out_dtype=jnp.float32)
    x = x.reshape(b, nh * nw, width)
    cls = jnp.broadcast_to(
        vp["class_embedding"].astype(jnp.float32)[None, None], (b, 1, width))
    x = jnp.concatenate([cls, x], axis=1) + vp["pos_embed"][None]
    s = x.shape[1]
    x = pallas_layernorm(x.reshape(b * s, width),
                         vp["ln_pre_g"], vp["ln_pre_b"])        # bf16 stream
    for blk in vp["blocks"]:
        x = residual_block(x, blk, b, s, cfg["v_heads"], causal=False)
    cls_tok = x.reshape(b, s, width)[:, 0, :]
    # fused ln_post + output projection, f32 features
    return pallas_linear(cls_tok, vp["proj"],
                         ln=(vp["ln_post_g"], vp["ln_post_b"]),
                         out_dtype=jnp.float32)


def encode_text(text, tp, cfg):
    b, s = text.shape
    width = cfg["t_width"]
    x = jnp.take(tp["token_embedding"], text, axis=0) + tp["pos_embed"][None]
    x = x.astype(jnp.bfloat16).reshape(b * s, width)
    for blk in tp["blocks"]:
        x = residual_block(x, blk, b, s, cfg["t_heads"], causal=True)
    eot = jnp.argmax(text, axis=-1)                   # EOT = max token id
    x = x.reshape(b, s, width)[jnp.arange(b), eot]    # (b, width)
    # fused ln_final + text_projection (LN is per-token, so exact)
    return pallas_linear(x, tp["text_projection"],
                         ln=(tp["ln_final_g"], tp["ln_final_b"]),
                         out_dtype=jnp.float32)


def clip_forward(params, image, text):
    """Equivalent of ClipWrapper.forward -> clip.model.CLIP.forward."""
    img_feat = encode_image(image, params["visual"], params["cfg"])
    txt_feat = encode_text(text, params["text"], params["cfg"])
    return pallas_clip_logits(img_feat, txt_feat, params["logit_scale"])


# --------------------------------------------------------------------------
# Deterministic parameter init (synthetic weights, CLIP-like shapes).
# Matmul weights stored bf16 (HBM traffic / MXU); biases & LN params f32.
# --------------------------------------------------------------------------
def _dense(key, shape, scale=0.02, dtype=jnp.bfloat16):
    return (scale * jax.random.normal(key, shape, jnp.float32)).astype(dtype)


def init_block(key, width):
    ks = jax.random.split(key, 4)
    return dict(
        ln1_g=jnp.ones((width,), jnp.float32),
        ln1_b=jnp.zeros((width,), jnp.float32),
        w_qkv=_dense(ks[0], (width, 3 * width)),
        b_qkv=jnp.zeros((3 * width,), jnp.float32),
        w_o=_dense(ks[1], (width, width)),
        b_o=jnp.zeros((width,), jnp.float32),
        ln2_g=jnp.ones((width,), jnp.float32),
        ln2_b=jnp.zeros((width,), jnp.float32),
        w_fc=_dense(ks[2], (width, 4 * width)),
        b_fc=jnp.zeros((4 * width,), jnp.float32),
        w_proj=_dense(ks[3], (4 * width, width)),
        b_proj=jnp.zeros((width,), jnp.float32),
    )


def init_clip_params(key):
    cfg = dict(embed_dim=32, image_size=16, patch=8, v_width=32, v_layers=2,
               v_heads=2, vocab=64, ctx=8, t_width=32, t_layers=2, t_heads=2)
    kv, kt, _ = jax.random.split(key, 3)
    n_patches = (cfg["image_size"] // cfg["patch"]) ** 2

    kvs = jax.random.split(kv, 4 + cfg["v_layers"])
    visual = dict(
        conv_w=_dense(kvs[0], (3 * cfg["patch"] * cfg["patch"], cfg["v_width"])),
        class_embedding=_dense(kvs[1], (cfg["v_width"],), dtype=jnp.float32),
        pos_embed=_dense(kvs[2], (n_patches + 1, cfg["v_width"]),
                         dtype=jnp.float32),
        ln_pre_g=jnp.ones((cfg["v_width"],), jnp.float32),
        ln_pre_b=jnp.zeros((cfg["v_width"],), jnp.float32),
        ln_post_g=jnp.ones((cfg["v_width"],), jnp.float32),
        ln_post_b=jnp.zeros((cfg["v_width"],), jnp.float32),
        proj=_dense(kvs[3], (cfg["v_width"], cfg["embed_dim"])),
        blocks=[init_block(kvs[4 + i], cfg["v_width"])
                for i in range(cfg["v_layers"])],
    )

    kts = jax.random.split(kt, 3 + cfg["t_layers"])
    text = dict(
        token_embedding=_dense(kts[0], (cfg["vocab"], cfg["t_width"]),
                               dtype=jnp.float32),
        pos_embed=_dense(kts[1], (cfg["ctx"], cfg["t_width"]),
                         dtype=jnp.float32),
        ln_final_g=jnp.ones((cfg["t_width"],), jnp.float32),
        ln_final_b=jnp.zeros((cfg["t_width"],), jnp.float32),
        text_projection=_dense(kts[2], (cfg["t_width"], cfg["embed_dim"])),
        blocks=[init_block(kts[3 + i], cfg["t_width"])
                for i in range(cfg["t_layers"])],
    )

    return dict(
        cfg=cfg,
        visual=visual,
        text=text,
        logit_scale=jnp.array(math.log(1.0 / 0.07), jnp.float32),
    )


# TODO(synk): loading real pretrained CLIP / open_clip / HF checkpoints and
# tokenization (the ClipWrapper constructor's job) has no Pallas equivalent;
# weights here are synthetic.

if __name__ == "__main__":
    key = jax.random.PRNGKey(0)
    kp, ki, kt = jax.random.split(key, 3)

    params = init_clip_params(kp)

    # image: NCHW like PyTorch; text: int token ids with EOT (= max id) last.
    image = jax.random.normal(ki, (2, 3, 16, 16), jnp.float32)
    vocab, ctx = params["cfg"]["vocab"], params["cfg"]["ctx"]
    text = jax.random.randint(kt, (2, ctx), 1, vocab - 1).astype(jnp.int32)
    text = text.at[:, -1].set(vocab - 1)   # EOT token at the end

    logits_per_image, logits_per_text = clip_forward(params, image, text)
    jax.block_until_ready((logits_per_image, logits_per_text))

    assert logits_per_image.shape == (2, 2)
    assert logits_per_text.shape == (2, 2)
    assert bool(jnp.all(jnp.isfinite(logits_per_image)))
    assert bool(jnp.allclose(logits_per_text, logits_per_image.T))
    print("KERNEL_OK")
</pallas_src>

<mosaic_0001>
module attributes {stable_mosaic.version = 11 : i64} {
  func.func @kernel(%arg0: i32, %arg1: i32, %arg2: i32, %arg3: memref<8x192xf32, #tpu.memory_space<vmem>>, %arg4: memref<192x32xbf16, #tpu.memory_space<vmem>>, %arg5: memref<8x32xf32, #tpu.memory_space<vmem>>) attributes {dimension_semantics = [#tpu.dimension_semantics<parallel>, #tpu.dimension_semantics<parallel>, #tpu.dimension_semantics<arbitrary>], iteration_bounds = array<i64: 1, 1, 1>, scalar_prefetch = 0 : i64, scratch_operands = 0 : i64, tpu.core_type = #tpu.core_type<tc>, window_params = [{transform_indices = @transform_0, window_bounds = array<i64: 8, 192>}, {transform_indices = @transform_1, window_bounds = array<i64: 192, 32>}, {transform_indices = @transform_2, window_bounds = array<i64: 8, 32>}]} {
    %c0 = arith.constant 0 : index
    %c0_0 = arith.constant 0 : index
    %0 = vector.load %arg3[%c0, %c0_0] : memref<8x192xf32, #tpu.memory_space<vmem>>, vector<8x192xf32>
    %1 = arith.truncf %0 : vector<8x192xf32> to vector<8x192xbf16>
    %c0_1 = arith.constant 0 : index
    %c0_2 = arith.constant 0 : index
    %2 = vector.load %arg4[%c0_1, %c0_2] : memref<192x32xbf16, #tpu.memory_space<vmem>>, vector<192x32xbf16>
    %cst = arith.constant dense<0.000000e+00> : vector<8x32xf32>
    %3 = tpu.matmul %1, %2, %cst {dimension_numbers = #tpu.dot_dimension_numbers<[1], [0], [0], [1], [0, 0, 1, 1], [], []>} : vector<8x192xbf16>, vector<192x32xbf16>, vector<8x32xf32> -> vector<8x32xf32>
    %c0_3 = arith.constant 0 : index
    %c0_4 = arith.constant 0 : index
    %4 = vector.load %arg5[%c0_3, %c0_4] : memref<8x32xf32, #tpu.memory_space<vmem>>, vector<8x32xf32>
    tpu.vector_store %arg5[%c0_3, %c0_4], %3 {strides = array<i32>} : memref<8x32xf32, #tpu.memory_space<vmem>>, vector<8x32xf32>,
    return
  }
  func.func @transform_0(%arg0: i32, %arg1: i32, %arg2: i32) -> (i32, i32) {
    %c0_i32 = arith.constant 0 : i32
    return %arg0, %arg2 : i32, i32
  }
  func.func @transform_1(%arg0: i32, %arg1: i32, %arg2: i32) -> (i32, i32) {
    %c0_i32 = arith.constant 0 : i32
    return %arg2, %arg1 : i32, i32
  }
  func.func @transform_2(%arg0: i32, %arg1: i32, %arg2: i32) -> (i32, i32) {
    %c0_i32 = arith.constant 0 : i32
    return %arg0, %arg1 : i32, i32
  }
}

</mosaic_0001>

<llo_original>
// kernel: tpu_custom_call.1
$region0: #{tpu_custom_call.1}
  #allocation0 [shape = 'u32[]', space=smem, size = 0x4, offset = 0x4, fixed_abs, tag = 'smem constant byte address 0x4 - core index']
  #allocation1 [shape = 'u32[144,128]{1,0:T(1,128)}', space=vmem, size = 0x12000, scoped, tag = 'internal scratch']
  %s0 = inlined_call_operand.vmem [shape: f32[8,192], index: 0, kind: input, shape index: {}]
  %s1 = inlined_call_operand.vmem [shape: bf16[192,32], index: 1, kind: input, shape index: {}]
  %s2 = inlined_call_operand.hbm [shape: f32[8,32], index: 2, kind: output, shape index: {}]
  %s3 = sld [smem:[#allocation0]]
  $region18: #{tpu_custom_call.1} parent=0
    _
  %s5 = ssub.s32 1, %s3
  %s6 = scalar_select 0, %s5, %s3
  $region1: #{tpu_custom_call.1} parent=0
    #allocation2 [shape = 'u8[4096]{0}', space=vmem, size = 0x1000, scoped, tag = 'output window, operand 0, single buffered']
    #allocation3 [shape = 's32[1]{0}', space=sflag, size = 0x4, scoped, tag = 'scoped memory for tpu_custom_call.1']
    %7 = vsyncpa [#allocation3], 0
    // Predicated region
    $region2: #{tpu_custom_call.1} parent=1 // pred_check
      _
    $region3: #{tpu_custom_call.1} parent=1 // pred_check_branch
      %9 = sbr.rel (0) target = $region5
    $region4: #{tpu_custom_call.1} parent=1 // pred_region
      _
    $region5: #{tpu_custom_call.1} parent=1 // pred_fallthru
      _
    // Predicated region
    $region6: #{tpu_custom_call.1} parent=1 // pred_check
      _
    $region7: #{tpu_custom_call.1} parent=1 // pred_check_branch
      %11 = sbr.rel (0) target = $region9
    $region8: #{tpu_custom_call.1} parent=1 // pred_region
      _
    $region9: #{tpu_custom_call.1} parent=1 // pred_fallthru
      _
    %v13 = vld [vmem:[%s0] sm:$0xff]
    %v14 = vld [vmem:[%s0 + $0x8] sm:$0xff]
    %v15 = vpack.c.bf16 %v13, %v13
    %v16 = vpack.c.bf16 %v14, %v14
    %v17 = vld [vmem:[%s1] sm:$0xf]
    %v18 = vld [vmem:[%s1 + $0x4] sm:$0xf]
    %v19 = vld [vmem:[%s1 + $0x8] sm:$0xf]
    %v20 = vld [vmem:[%s1 + $0xc] sm:$0xf]
    %v21 = vld [vmem:[%s1 + $0x10] sm:$0xf]
    %v22 = vld [vmem:[%s1 + $0x14] sm:$0xf]
    %v23 = vld [vmem:[%s1 + $0x18] sm:$0xf]
    %v24 = vld [vmem:[%s1 + $0x1c] sm:$0xf]
    %v25 = vld [vmem:[%s1 + $0x20] sm:$0xf]
    %v26 = vld [vmem:[%s1 + $0x24] sm:$0xf]
    %v27 = vld [vmem:[%s1 + $0x28] sm:$0xf]
    %v28 = vld [vmem:[%s1 + $0x2c] sm:$0xf]
    %v29 = vld [vmem:[%s1 + $0x30] sm:$0xf]
    %v30 = vld [vmem:[%s1 + $0x34] sm:$0xf]
    %v31 = vld [vmem:[%s1 + $0x38] sm:$0xf]
    %v32 = vld [vmem:[%s1 + $0x3c] sm:$0xf]
    %v33 = vld [vmem:[%s1 + $0x40] sm:$0xf]
    %v34 = vld [vmem:[%s1 + $0x44] sm:$0xf]
    %v35 = vld [vmem:[%s1 + $0x48] sm:$0xf]
    %v36 = vld [vmem:[%s1 + $0x4c] sm:$0xf]
    %v37 = vld [vmem:[%s1 + $0x50] sm:$0xf]
    %v38 = vld [vmem:[%s1 + $0x54] sm:$0xf]
    %v39 = vld [vmem:[%s1 + $0x58] sm:$0xf]
    %v40 = vld [vmem:[%s1 + $0x5c] sm:$0xf]
    %v65 = vunpack.c.l.b16 %v17
    %v66 = vunpack.c.l.b16 %v18
    %v67 = vunpack.c.l.b16 %v19
    %v68 = vunpack.c.l.b16 %v20
    %v69 = vunpack.c.l.b16 %v21
    %v70 = vunpack.c.l.b16 %v22
    %v71 = vunpack.c.l.b16 %v23
    %v72 = vunpack.c.l.b16 %v24
    %v73 = vunpack.c.l.b16 %v25
    %v74 = vunpack.c.l.b16 %v26
    %v75 = vunpack.c.l.b16 %v27
    %v76 = vunpack.c.l.b16 %v28
    %v77 = vunpack.c.l.b16 %v29
    %v78 = vunpack.c.l.b16 %v30
    %v79 = vunpack.c.l.b16 %v31
    %v80 = vunpack.c.l.b16 %v32
    %v81 = vunpack.c.l.b16 %v33
    %v82 = vunpack.c.l.b16 %v34
    %v83 = vunpack.c.l.b16 %v35
    %v84 = vunpack.c.l.b16 %v36
    %v85 = vunpack.c.l.b16 %v37
    %v86 = vunpack.c.l.b16 %v38
    %v87 = vunpack.c.l.b16 %v39
    %v88 = vunpack.c.l.b16 %v40
    %v89 = vpack.c.b16 %v66, %v65
    %v90 = vpack.c.b16 %v68, %v67
    %v91 = vpack.c.b16 %v70, %v69
    %v92 = vpack.c.b16 %v72, %v71
    %v93 = vpack.c.b16 %v74, %v73
    %v94 = vpack.c.b16 %v76, %v75
    %v95 = vpack.c.b16 %v78, %v77
    %v96 = vpack.c.b16 %v80, %v79
    %v97 = vpack.c.b16 %v82, %v81
    %v98 = vpack.c.b16 %v84, %v83
    %v99 = vpack.c.b16 %v86, %v85
    %v100 = vpack.c.b16 %v88, %v87
    %vm113 = vcmask 523264
    %v115 = vsel %vm113, %v16, 0
    %117 = vmatprep.subr.bf16.mxu0 0
    %118 = vmatpush1.bf16.msra.mxu0 %v96
    %119 = vmatprep.subr.bf16.mxu0 0
    %120 = vmatpush1.bf16.msra.mxu0 %v95
    %121 = vmatprep.subr.bf16.mxu0 0
    %122 = vmatpush1.bf16.msra.mxu0 %v94
    %123 = vmatprep.subr.bf16.mxu0 0
    %124 = vmatpush1.bf16.msra.mxu0 %v93
    %125 = vmatprep.subr.bf16.mxu0 0
    %126 = vmatpush1.bf16.msra.mxu0 %v92
    %127 = vmatprep.subr.bf16.mxu0 0
    %128 = vmatpush1.bf16.msra.mxu0 %v91
    %129 = vmatprep.subr.bf16.mxu0 0
    %130 = vmatpush1.bf16.msra.mxu0 %v90
    %131 = vmatprep.subr.bf16.mxu0 0
    %132 = vmatpush1.bf16.msra.mxu0 %v89
    %133 = vmatprep.subr.bf16.mxu0 0
    %134 = vmatpush2.bf16.msra.mxu0 0
    %135 = vmatprep.subr.bf16.mxu0 0
    %136 = vmatpush2.bf16.msra.mxu0 0
    %137 = vmatprep.subr.bf16.mxu0 0
    %138 = vmatpush2.bf16.msra.mxu0 0
    %139 = vmatprep.subr.bf16.mxu0 0
    %140 = vmatpush2.bf16.msra.mxu0 0
    %141 = vmatprep.subr.bf16.mxu0 0
    %142 = vmatpush2.bf16.msra.mxu0 %v100
    %143 = vmatprep.subr.bf16.mxu0 0
    %144 = vmatpush2.bf16.msra.mxu0 %v99
    %145 = vmatprep.subr.bf16.mxu0 0
    %146 = vmatpush2.bf16.msra.mxu0 %v98
    %147 = vmatprep.subr.bf16.mxu0 0
    %148 = vmatpush2.bf16.msra.mxu0 %v97
    %149 = vmatprep.mubr.bf16.mxu0 %v115
    %150 = vmatmul.mubr.bf16.gmra.mxu0 %v15
    %v151 = vpop.f32.mrf.mxu0
    %v152 = vadd.f32 0.0, %v151
    %v153 = vpop.f32.mrf.mxu0
    %v154 = vpop.f32.mrf.mxu0
    %v155 = vpop.f32.mrf.mxu0
    %156 = vdwg.mxu0
    %vm157 = vcmask 261120
    %158 = vst.msk [vmem:[#allocation2] sm:$0xff] %vm157, %v152
    // Predicated region
    $region10: #{tpu_custom_call.1} parent=1 // pred_check
      _
    $region11: #{tpu_custom_call.1} parent=1 // pred_check_branch
      %160 = sbr.rel (0) target = $region13
    $region12: #{tpu_custom_call.1} parent=1 // pred_region
      %s162 = ssub.s32 128, 128
      %163 = vsyncadd [#allocation3], %s162
      %s165 = sshll.u32 [#allocation2], 4
      %s166 = int_to_ptr.vmem [resolvable:$true] %s165
      %168 = dma.vmem_to_hbm [thread:$0]  %s166, 128, %s2, [#allocation3]
    $region13: #{tpu_custom_call.1} parent=1 // pred_fallthru
      _
    // Predicated region
    $region14: #{tpu_custom_call.1} parent=1 // pred_check
      _
    $region15: #{tpu_custom_call.1} parent=1 // pred_check_branch
      %170 = sbr.rel (0) target = $region17
    $region16: #{tpu_custom_call.1} parent=1 // pred_region
      %171 = dma.done [#allocation3], 128
    $region17: #{tpu_custom_call.1} parent=1 // pred_fallthru
      _
    %172 = vsyncpa [#allocation3], 1

</llo_original>
